<compile_context>
chip_gen: v7x
topology: tpu7x:2x2x1
jax: 0.10.0
libtpu: 0.0.40
codegen_flags: <defaults>
</compile_context>

<pallas_src>
import functools

import jax
import jax.numpy as jnp
from jax import lax
from jax.experimental import pallas as pl
from jax.experimental.pallas import tpu as pltpu

EPS = 1e-6  # matches torch.nn.functional.pairwise_distance default eps


def _cdiv(a, b):
    return -(-a // b)


def _round_up(x, m):
    return ((x + m - 1) // m) * m


def _vmem_plan():
    """Generation-gated VMEM budget for pipelined buffers and the compiler VMEM limit."""
    try:
        cap = int(pltpu.get_tpu_info().vmem_capacity_bytes)
    except Exception:
        cap = 64 * 1024 * 1024  # conservative: fits every generation (v7x has 64 MiB/TC)
    budget = cap // 2                                     # bytes for all pipelined buffers
    vmem_limit = min(cap - 8 * 1024 * 1024, (cap * 3) // 4)
    return budget, vmem_limit


def _choose_tile_rows(batch, dim, itemsize, budget_bytes):
    """Rows per batch tile: as large as the VMEM budget allows, but >= 2 tiles."""
    row_align = max(8, 32 // itemsize)     # 8 rows for f32, 16 for bf16 (sublane packing)
    if batch < 2 * row_align:
        # Tiny problem: one full-extent block (block dim == array dim is always legal),
        # no padding rows exist, no mask needed.
        return batch
    # VMEM bytes per batch row across all pipelined buffers:
    #   2 embeddings x 2 buffers x dim*itemsize
    # + 2 label buffers x one 128-lane padded row (the (TB,1) block pads to 128 lanes).
    per_row = 2 * 2 * dim * itemsize + 2 * 128 * 4
    tb = budget_bytes // per_row
    tb = max(row_align, (tb // row_align) * row_align)
    # Clamp so there are at least (and preferably exactly) two balanced tiles, letting
    # the "parallel" grid axis shard across both TensorCores on v7x.
    tb_half = _round_up(_cdiv(batch, 2), row_align)
    return min(tb, tb_half)


def _contrastive_kernel(x1_ref, x2_ref, lbl_ref, out_ref, *,
                        batch, tile_rows, margin, mask_last):
    """One batch tile: per-row contrastive loss summed into a scalar partial."""
    # Cast on the VPU, not in the wrapper: bf16 inputs DMA at half the HBM bytes while
    # all arithmetic stays f32 (keeps v5e, which has no bf16 VPU/EUP, on its fast path).
    x1 = x1_ref[...].astype(jnp.float32)
    x2 = x2_ref[...].astype(jnp.float32)
    diff = x1 - x2 + EPS                                    # (TB, D)
    sq = jnp.sum(diff * diff, axis=-1, keepdims=True)       # (TB, 1) squared distance
    d = jnp.sqrt(sq)                                        # (TB, 1) euclidean distance

    lbl = lbl_ref[...].astype(jnp.float32)                  # (TB, 1)
    hinge = jnp.maximum(margin - d, 0.0)
    # Fused form of (1-l)*sq + l*hinge^2 -> one fewer lane-sparse (TB,1) intermediate.
    per_row = sq + lbl * (hinge * hinge - sq)               # (TB, 1)

    def write(total):
        # Scalar partial into element [0,0] of this tile's (8,128)-aligned output block
        # (zeros elsewhere); the wrapper finishes with a plain jnp.sum.
        r = lax.broadcasted_iota(jnp.int32, (8, 128), 0)
        c = lax.broadcasted_iota(jnp.int32, (8, 128), 1)
        out_ref[...] = jnp.where((r == 0) & (c == 0), total, 0.0)

    if mask_last:
        # Only the tile containing the batch boundary pays for the iota + mask; all
        # other tiles (and the whole kernel when B % TB == 0) skip it entirely.
        i = pl.program_id(0)
        is_last = i == pl.num_programs(0) - 1

        @pl.when(is_last)
        def _():
            row_ids = i * tile_rows + lax.broadcasted_iota(jnp.int32, per_row.shape, 0)
            write(jnp.sum(jnp.where(row_ids < batch, per_row, 0.0)))

        @pl.when(jnp.logical_not(is_last))
        def _():
            write(jnp.sum(per_row))
    else:
        write(jnp.sum(per_row))


def contrastive_loss(output1, output2, label, margin=1.0):
    """output1, output2: (B, D) float32/bfloat16; label: (B,). Returns scalar float32."""
    B, D = output1.shape
    itemsize = jnp.dtype(output1.dtype).itemsize
    budget, vmem_limit = _vmem_plan()
    tb = _choose_tile_rows(B, D, itemsize, budget)
    num_tiles = _cdiv(B, tb)
    mask_last = (B % tb) != 0  # partial last block -> in-kernel mask is load-bearing

    # Keep the label in its native dtype (cast happens in-kernel); only a cheap reshape.
    lbl = label.reshape(B, 1)

    kernel = functools.partial(
        _contrastive_kernel, batch=B, tile_rows=tb, margin=float(margin),
        mask_last=mask_last)

    partials = pl.pallas_call(
        kernel,
        out_shape=jax.ShapeDtypeStruct((num_tiles * 8, 128), jnp.float32),
        grid_spec=pltpu.PrefetchScalarGridSpec(
            num_scalar_prefetch=0,
            grid=(num_tiles,),
            in_specs=[
                pl.BlockSpec((tb, D), lambda i: (i, 0)),   # default double-buffering
                pl.BlockSpec((tb, D), lambda i: (i, 0)),
                pl.BlockSpec((tb, 1), lambda i: (i, 0)),
            ],
            out_specs=pl.BlockSpec((8, 128), lambda i: (i, 0)),
        ),
        compiler_params=pltpu.CompilerParams(
            # Batch tiles are fully independent -> shard the grid across both
            # TensorCores on v7x; harmless on single-TC v5e/v6e.
            dimension_semantics=("parallel",),
            vmem_limit_bytes=int(vmem_limit),
        ),
    )(output1, output2, lbl)

    # Final mean over the true (unpadded) batch.
    return jnp.sum(partials) / B


if __name__ == "__main__":
    key = jax.random.PRNGKey(0)
    k1, k2, k3 = jax.random.split(key, 3)

    def reference(o1, o2, lbl, margin=1.0):
        o1 = o1.astype(jnp.float32)
        o2 = o2.astype(jnp.float32)
        d = jnp.sqrt(jnp.sum((o1 - o2 + EPS) ** 2, axis=-1))
        return jnp.mean((1.0 - lbl) * d ** 2
                        + lbl * jnp.maximum(margin - d, 0.0) ** 2)

    # Case 1: small even batch -> exactly two tiles, no partial block, no mask.
    B, D = 16, 32
    o1 = jax.random.normal(k1, (B, D), dtype=jnp.float32)
    o2 = jax.random.normal(k2, (B, D), dtype=jnp.float32)
    lbl = jax.random.bernoulli(k3, 0.5, (B,)).astype(jnp.float32)
    loss = jax.block_until_ready(contrastive_loss(o1, o2, lbl, margin=1.0))
    ref = reference(o1, o2, lbl)
    assert jnp.allclose(loss, ref, rtol=1e-5, atol=1e-5), (loss, ref)

    # Case 2: batch that does not divide the tile -> partial last block + boundary mask.
    B2 = 20
    o1b = jax.random.normal(k1, (B2, D), dtype=jnp.float32)
    o2b = jax.random.normal(k2, (B2, D), dtype=jnp.float32)
    lblb = jax.random.bernoulli(k3, 0.5, (B2,)).astype(jnp.float32)
    loss2 = jax.block_until_ready(contrastive_loss(o1b, o2b, lblb, margin=1.0))
    ref2 = reference(o1b, o2b, lblb)
    assert jnp.allclose(loss2, ref2, rtol=1e-5, atol=1e-5), (loss2, ref2)

    # Case 3: bf16 embeddings -> half the HBM bytes, f32 cast on the VPU in-kernel.
    B3, D3 = 64, 32
    o1c = jax.random.normal(k1, (B3, D3), dtype=jnp.float32).astype(jnp.bfloat16)
    o2c = jax.random.normal(k2, (B3, D3), dtype=jnp.float32).astype(jnp.bfloat16)
    lblc = jax.random.bernoulli(k3, 0.5, (B3,)).astype(jnp.float32)
    loss3 = jax.block_until_ready(contrastive_loss(o1c, o2c, lblc, margin=1.0))
    ref3 = reference(o1c, o2c, lblc)
    assert jnp.allclose(loss3, ref3, rtol=1e-4, atol=1e-4), (loss3, ref3)

    print("KERNEL_OK")
</pallas_src>

<mosaic_0001>
module attributes {stable_mosaic.version = 11 : i64} {
  func.func @_contrastive_kernel(%arg0: i32, %arg1: memref<8x32xf32, #tpu.memory_space<vmem>>, %arg2: memref<8x32xf32, #tpu.memory_space<vmem>>, %arg3: memref<8x1xf32, #tpu.memory_space<vmem>>, %arg4: memref<8x128xf32, #tpu.memory_space<vmem>>) attributes {dimension_semantics = [#tpu.dimension_semantics<parallel>], iteration_bounds = array<i64: 2>, scalar_prefetch = 0 : i64, scratch_operands = 0 : i64, tpu.core_type = #tpu.core_type<tc>, window_params = [{transform_indices = @transform_0, window_bounds = array<i64: 8, 32>}, {transform_indices = @transform_1, window_bounds = array<i64: 8, 32>}, {transform_indices = @transform_2, window_bounds = array<i64: 8, 1>}, {transform_indices = @transform_3, window_bounds = array<i64: 8, 128>}]} {
    %c0 = arith.constant 0 : index
    %c0_0 = arith.constant 0 : index
    %0 = vector.load %arg1[%c0, %c0_0] : memref<8x32xf32, #tpu.memory_space<vmem>>, vector<8x32xf32>
    %c0_1 = arith.constant 0 : index
    %c0_2 = arith.constant 0 : index
    %1 = vector.load %arg2[%c0_1, %c0_2] : memref<8x32xf32, #tpu.memory_space<vmem>>, vector<8x32xf32>
    %2 = arith.subf %0, %1 : vector<8x32xf32>
    %cst = arith.constant 9.99999997E-7 : f32
    %3 = vector.broadcast %cst : f32 to vector<8x32xf32>
    %4 = arith.addf %2, %3 : vector<8x32xf32>
    %5 = arith.mulf %4, %4 : vector<8x32xf32>
    %cst_3 = arith.constant dense<0.000000e+00> : vector<8xf32>
    %6 = vector.multi_reduction <add>, %5, %cst_3 [1] : vector<8x32xf32> to vector<8xf32>
    %7 = vector.shape_cast %6 : vector<8xf32> to vector<8x1xf32>
    %8 = math.sqrt %7 : vector<8x1xf32>
    %c0_4 = arith.constant 0 : index
    %c0_5 = arith.constant 0 : index
    %9 = vector.load %arg3[%c0_4, %c0_5] : memref<8x1xf32, #tpu.memory_space<vmem>>, vector<8x1xf32>
    %cst_6 = arith.constant 1.000000e+00 : f32
    %10 = vector.broadcast %cst_6 : f32 to vector<8x1xf32>
    %11 = arith.subf %10, %8 : vector<8x1xf32>
    %cst_7 = arith.constant 0.000000e+00 : f32
    %12 = vector.broadcast %cst_7 : f32 to vector<8x1xf32>
    %13 = arith.maximumf %11, %12 : vector<8x1xf32>
    %14 = arith.mulf %13, %13 : vector<8x1xf32>
    %15 = arith.subf %14, %7 : vector<8x1xf32>
    %16 = arith.mulf %9, %15 : vector<8x1xf32>
    %17 = arith.addf %7, %16 : vector<8x1xf32>
    %18 = vector.shape_cast %17 : vector<8x1xf32> to vector<1x8x1xf32>
    %cst_8 = arith.constant dense<0.000000e+00> : vector<1xf32>
    %19 = vector.multi_reduction <add>, %18, %cst_8 [1, 2] : vector<1x8x1xf32> to vector<1xf32>
    %20 = vector.shape_cast %19 : vector<1xf32> to vector<1x1x1xf32>
    %21 = vector.extract %20[0, 0, 0] : f32 from vector<1x1x1xf32>
    %22 = tpu.iota {dimensions = array<i32: 0>} : vector<8x128xi32>
    %23 = tpu.iota {dimensions = array<i32: 1>} : vector<8x128xi32>
    %c0_i32 = arith.constant 0 : i32
    %24 = vector.broadcast %c0_i32 : i32 to vector<8x128xi32>
    %25 = arith.cmpi eq, %22, %24 : vector<8x128xi32>
    %c0_i32_9 = arith.constant 0 : i32
    %26 = vector.broadcast %c0_i32_9 : i32 to vector<8x128xi32>
    %27 = arith.cmpi eq, %23, %26 : vector<8x128xi32>
    %28 = arith.andi %25, %27 : vector<8x128xi1>
    %cst_10 = arith.constant 0.000000e+00 : f32
    %29 = vector.broadcast %21 : f32 to vector<8x128xf32>
    %30 = vector.broadcast %cst_10 : f32 to vector<8x128xf32>
    %31 = arith.select %28, %29, %30 : vector<8x128xi1>, vector<8x128xf32>
    %c0_11 = arith.constant 0 : index
    %c0_12 = arith.constant 0 : index
    %32 = vector.load %arg4[%c0_11, %c0_12] : memref<8x128xf32, #tpu.memory_space<vmem>>, vector<8x128xf32>
    tpu.vector_store %arg4[%c0_11, %c0_12], %31 {strides = array<i32>} : memref<8x128xf32, #tpu.memory_space<vmem>>, vector<8x128xf32>,
    return
  }
  func.func @transform_0(%arg0: i32) -> (i32, i32) {
    %c0_i32 = arith.constant 0 : i32
    %c0_i32_0 = arith.constant 0 : i32
    return %arg0, %c0_i32 : i32, i32
  }
  func.func @transform_1(%arg0: i32) -> (i32, i32) {
    %c0_i32 = arith.constant 0 : i32
    %c0_i32_0 = arith.constant 0 : i32
    return %arg0, %c0_i32 : i32, i32
  }
  func.func @transform_2(%arg0: i32) -> (i32, i32) {
    %c0_i32 = arith.constant 0 : i32
    %c0_i32_0 = arith.constant 0 : i32
    return %arg0, %c0_i32 : i32, i32
  }
  func.func @transform_3(%arg0: i32) -> (i32, i32) {
    %c0_i32 = arith.constant 0 : i32
    %c0_i32_0 = arith.constant 0 : i32
    return %arg0, %c0_i32 : i32, i32
  }
}

</mosaic_0001>

<llo_original>
// kernel: tpu_custom_call.1
$region0: #{tpu_custom_call.1}
  #allocation0 [shape = 'u32[]', space=smem, size = 0x4, offset = 0x4, fixed_abs, tag = 'smem constant byte address 0x4 - core index']
  #allocation1 [shape = 'u32[144,128]{1,0:T(1,128)}', space=vmem, size = 0x12000, scoped, tag = 'internal scratch']
  %s0 = inlined_call_operand.vmem [shape: f32[16,32], index: 0, kind: input, shape index: {}]
  %s1 = inlined_call_operand.hbm [shape: f32[16,32], index: 1, kind: input, shape index: {}]
  %s2 = inlined_call_operand.vmem [shape: f32[16,1], index: 2, kind: input, shape index: {}]
  %s3 = inlined_call_operand.hbm [shape: f32[16,128], index: 3, kind: output, shape index: {}]
  %s4 = sld [smem:[#allocation0]]
  $region49: #{tpu_custom_call.1} parent=0
    _
  %s6 = ssub.s32 1, %s4
  %s7 = scalar_select 0, %s6, %s4
  $region1: #{tpu_custom_call.1} parent=0
    #allocation2 [shape = 'u8[8192]{0}', space=vmem, size = 0x2000, scoped, tag = 'input window, operand 1']
    #allocation3 [shape = 's32[2]{0}', space=sflag, size = 0x8, scoped, tag = 'scoped memory for tpu_custom_call.1']
    #allocation4 [shape = 's32[2]{0}', space=sflag, size = 0x8, scoped, tag = 'scoped memory for tpu_custom_call.1']
    #allocation5 [shape = 'u8[8192]{0}', space=vmem, size = 0x2000, scoped, tag = 'output window, operand 0']
    %8 = vsyncpa [#allocation3], 0
    %s9 = scalar_lea.sflag [#allocation3], 1
    %10 = vsyncpa %s9, 0
    %11 = vsyncpa [#allocation4], 0
    %s12 = scalar_lea.sflag [#allocation4], 1
    %13 = vsyncpa %s12, 0
    loop: start=0, step=1, limit=4
    $region2: #{tpu_custom_call.1} parent=1 // loop_pre_header
      _
    $region3: #{tpu_custom_call.1} parent=1 // loop_header
      %s15 = sphi 0, %s19
      %p16 = scmp.ge.s32.totalorder %s15, 4
      %s25 = sphi 0, %s27
      %s28 = sphi 0, %s25
      %s29 = sphi 0, %s28
      %s45 = sphi 0, %s29
      %s51 = sphi 0, %s53
      %s54 = sphi 0, %s51
      %s55 = sphi 0, %s54
      %s71 = sphi 0, %s55
      %s77 = sphi 0, %s79
      %s80 = sphi 0, %s77
      %s81 = sphi 0, %s80
      %s97 = sphi 0, %s81
      %s103 = sphi 0, %s105
      %s106 = sphi 0, %s103
      %s107 = sphi 0, %s106
      %s123 = sphi 0, %s107
    $region4: #{tpu_custom_call.1} parent=1 // loop_header_branch
      %18 = sbr.rel (%p16) target = $region8
    $region5: #{tpu_custom_call.1} parent=1 // loop_body
      %s20 = ssub.s32 %s15, 1
      %s21 = ssub.s32 %s15, 2
      %s22 = sadd.s32 %s15, 1
      %s23 = ssub.s32 %s15, %s22
      %p24 = scmp.eq.s32.totalorder %s23, 0
      %s26 = sadd.s32 %s25, 1
      %s27 = scalar_select %p24, %s25, %s26
      %p30 = pneg %p24
      %p31 = scmp.eq.s32.totalorder %s15, 1
      %p32 = por %p30, %p31
      %p33 = scmp.ne.s32.totalorder %s25, %s28
      %p34 = scmp.eq.s32.totalorder %s15, 0
      %p35 = por %p33, %p34
      %p36 = scmp.ne.s32.totalorder %s25, %s28
      %p37 = scmp.eq.s32.totalorder %s20, 1
      %p38 = por %p36, %p37
      %p39 = scmp.ne.s32.totalorder %s28, %s29
      %p40 = scmp.eq.s32.totalorder %s20, 0
      %p41 = por %p39, %p40
      %p42 = scmp.ne.s32.totalorder %s28, %s29
      %p43 = scmp.eq.s32.totalorder %s21, 1
      %p44 = por %p42, %p43
      %p46 = scmp.ne.s32.totalorder %s29, %s45
      %p47 = scmp.eq.s32.totalorder %s21, 0
      %p48 = por %p46, %p47
      %s49 = ssub.s32 %s15, %s22
      %p50 = scmp.eq.s32.totalorder %s49, 0
      %s52 = sadd.s32 %s51, 1
      %s53 = scalar_select %p50, %s51, %s52
      %p56 = pneg %p50
      %p57 = scmp.eq.s32.totalorder %s15, 1
      %p58 = por %p56, %p57
      %p59 = scmp.ne.s32.totalorder %s51, %s54
      %p60 = scmp.eq.s32.totalorder %s15, 0
      %p61 = por %p59, %p60
      %p62 = scmp.ne.s32.totalorder %s51, %s54
      %p63 = scmp.eq.s32.totalorder %s20, 1
      %p64 = por %p62, %p63
      %p65 = scmp.ne.s32.totalorder %s54, %s55
      %p66 = scmp.eq.s32.totalorder %s20, 0
      %p67 = por %p65, %p66
      %p68 = scmp.ne.s32.totalorder %s54, %s55
      %p69 = scmp.eq.s32.totalorder %s21, 1
      %p70 = por %p68, %p69
      %p72 = scmp.ne.s32.totalorder %s55, %s71
      %p73 = scmp.eq.s32.totalorder %s21, 0
      %p74 = por %p72, %p73
      %s75 = ssub.s32 %s15, %s22
      %p76 = scmp.eq.s32.totalorder %s75, 0
      %s78 = sadd.s32 %s77, 1
      %s79 = scalar_select %p76, %s77, %s78
      %p82 = pneg %p76
      %p83 = scmp.eq.s32.totalorder %s15, 1
      %p84 = por %p82, %p83
      %p85 = scmp.ne.s32.totalorder %s77, %s80
      %p86 = scmp.eq.s32.totalorder %s15, 0
      %p87 = por %p85, %p86
      %p88 = scmp.ne.s32.totalorder %s77, %s80
      %p89 = scmp.eq.s32.totalorder %s20, 1
      %p90 = por %p88, %p89
      %p91 = scmp.ne.s32.totalorder %s80, %s81
      %p92 = scmp.eq.s32.totalorder %s20, 0
      %p93 = por %p91, %p92
      %p94 = scmp.ne.s32.totalorder %s80, %s81
      %p95 = scmp.eq.s32.totalorder %s21, 1
      %p96 = por %p94, %p95
      %p98 = scmp.ne.s32.totalorder %s81, %s97
      %p99 = scmp.eq.s32.totalorder %s21, 0
      %p100 = por %p98, %p99
      %s101 = ssub.s32 %s15, %s22
      %p102 = scmp.eq.s32.totalorder %s101, 0
      %s104 = sadd.s32 %s103, 1
      %s105 = scalar_select %p102, %s103, %s104
      %p108 = pneg %p102
      %p109 = scmp.eq.s32.totalorder %s15, 1
      %p110 = por %p108, %p109
      %p111 = scmp.ne.s32.totalorder %s103, %s106
      %p112 = scmp.eq.s32.totalorder %s15, 0
      %p113 = por %p111, %p112
      %p114 = scmp.ne.s32.totalorder %s103, %s106
      %p115 = scmp.eq.s32.totalorder %s20, 1
      %p116 = por %p114, %p115
      %p117 = scmp.ne.s32.totalorder %s106, %s107
      %p118 = scmp.eq.s32.totalorder %s20, 0
      %p119 = por %p117, %p118
      %p120 = scmp.ne.s32.totalorder %s106, %s107
      %p121 = scmp.eq.s32.totalorder %s21, 1
      %p122 = por %p120, %p121
      %p124 = scmp.ne.s32.totalorder %s107, %s123
      %p125 = scmp.eq.s32.totalorder %s21, 0
      %p126 = por %p124, %p125
      %p127 = scmp.le.s32.totalorder 1, %s15
      %p128 = scmp.lt.s32.totalorder %s15, 3
      %p129 = pnand %p127, %p128
      %p130 = pneg %p129
      // Predicated region
      $region9: #{tpu_custom_call.1} parent=5 // pred_check
        _
      $region10: #{tpu_custom_call.1} parent=5 // pred_check_branch
        %132 = sbr.rel (%p129) target = $region12
      $region11: #{tpu_custom_call.1} parent=5 // pred_region
        %s133 = ssub.s32 %s15, 1
      $region12: #{tpu_custom_call.1} parent=5 // pred_fallthru
        _
      %p134 = scmp.lt.s32.totalorder %s15, 2
      // Predicated region
      $region13: #{tpu_custom_call.1} parent=5 // pred_check
        %p135 = pneg %p134
      $region14: #{tpu_custom_call.1} parent=5 // pred_check_branch
        %137 = sbr.rel (%p135) target = $region16
      $region15: #{tpu_custom_call.1} parent=5 // pred_region
        // Predicated region
        $region17: #{tpu_custom_call.1} parent=15 // pred_check
          %p138 = pneg %p35
        $region18: #{tpu_custom_call.1} parent=15 // pred_check_branch
          %140 = sbr.rel (%p138) target = $region20
        $region19: #{tpu_custom_call.1} parent=15 // pred_region
          %p141 = scmp.lt.s32.totalorder %s15, 1
          %s142 = scalar_select %p141, %s15, 1
          %s143 = smul.addr %s142, 8
          %s144 = scalar_lea.vmem %s0, %s143
        $region20: #{tpu_custom_call.1} parent=15 // pred_fallthru
          _
        // Predicated region
        $region21: #{tpu_custom_call.1} parent=15 // pred_check
          %p145 = pneg %p61
        $region22: #{tpu_custom_call.1} parent=15 // pred_check_branch
          %147 = sbr.rel (%p145) target = $region24
        $region23: #{tpu_custom_call.1} parent=15 // pred_region
          %s148 = sand.u32 %s51, 1
          %s149 = scalar_lea.sflag [#allocation3], %s148
          %s150 = sand.u32 %s51, 1
          %s151 = smul.addr %s150, 8
          %s152 = scalar_lea.vmem [#allocation2], %s151
          %s154 = ssub.s32 128, 128
          %155 = vsyncadd %s149, %s154
          %s156 = smul.addr %s15, 128
          %s157 = scalar_lea.hbm %s1, %s156
          %s159 = sshll.u32 %s152, 4
          %s160 = int_to_ptr.vmem [resolvable:$true] %s159
          %162 = dma.hbm_to_vmem [thread:$0]  %s157, 128, %s160, %s149
        $region24: #{tpu_custom_call.1} parent=15 // pred_fallthru
          _
        // Predicated region
        $region25: #{tpu_custom_call.1} parent=15 // pred_check
          %p163 = pneg %p87
        $region26: #{tpu_custom_call.1} parent=15 // pred_check_branch
          %165 = sbr.rel (%p163) target = $region28
        $region27: #{tpu_custom_call.1} parent=15 // pred_region
          %p166 = scmp.lt.s32.totalorder %s15, 1
          %s167 = scalar_select %p166, %s15, 1
          %s168 = smul.addr %s167, 8
          %s169 = scalar_lea.vmem %s2, %s168
        $region28: #{tpu_custom_call.1} parent=15 // pred_fallthru
          _
      $region16: #{tpu_custom_call.1} parent=5 // pred_fallthru
        _
      %p170 = scmp.le.s32.totalorder 1, %s15
      %p171 = scmp.lt.s32.totalorder %s15, 3
      %p172 = pnand %p170, %p171
      %p173 = pneg %p172
      // Predicated region
      $region29: #{tpu_custom_call.1} parent=5 // pred_check
        _
      $region30: #{tpu_custom_call.1} parent=5 // pred_check_branch
        %175 = sbr.rel (%p172) target = $region32
      $region31: #{tpu_custom_call.1} parent=5 // pred_region
        %s176 = ssub.s32 %s15, 1
        %s177 = sand.u32 %s54, 1
        %s178 = scalar_lea.sflag [#allocation3], %s177
        %s179 = sand.u32 %s54, 1
        %s180 = smul.addr %s179, 8
        %s181 = scalar_lea.vmem [#allocation2], %s180
        // Predicated region
        $region33: #{tpu_custom_call.1} parent=31 // pred_check
          %p182 = pneg %p67
        $region34: #{tpu_custom_call.1} parent=31 // pred_check_branch
          %184 = sbr.rel (%p182) target = $region36
        $region35: #{tpu_custom_call.1} parent=31 // pred_region
          %185 = dma.done %s178, 128
        $region36: #{tpu_custom_call.1} parent=31 // pred_fallthru
          _
        %p186 = scmp.lt.s32.totalorder %s20, 1
        %s187 = scalar_select %p186, %s20, 1
        %s188 = smul.addr %s187, 8
        %s189 = scalar_lea.vmem %s0, %s188
        %p190 = pneg %p41
        %p191 = pneg %p38
        %s192 = sand.u32 %s54, 1
        %s193 = scalar_lea.sflag [#allocation3], %s192
        %s194 = sand.u32 %s54, 1
        %s195 = smul.addr %s194, 8
        %s196 = scalar_lea.vmem [#allocation2], %s195
        %p197 = pneg %p67
        %p198 = pneg %p64
        %p199 = scmp.lt.s32.totalorder %s20, 1
        %s200 = scalar_select %p199, %s20, 1
        %s201 = smul.addr %s200, 8
        %s202 = scalar_lea.vmem %s2, %s201
        %p203 = pneg %p93
        %p204 = pneg %p90
        %p205 = pneg %p119
        %p206 = pneg %p116
        %s207 = sand.u32 %s106, 1
        %s208 = scalar_lea.sflag [#allocation4], %s207
        %s209 = sand.u32 %s106, 1
        %s210 = smul.addr %s209, 8
        %s211 = scalar_lea.vmem [#allocation5], %s210
        %p212 = scmp.lt.s32.totalorder %s20, 1
        %s213 = scalar_select %p212, %s20, 1
        %s214 = smul.addr %s213, 8
        %s215 = scalar_lea.vmem %s0, %s214
        %p216 = scmp.lt.s32.totalorder %s20, 1
        %s217 = scalar_select %p216, %s20, 1
        %s218 = smul.addr %s217, 8
        %s219 = scalar_lea.vmem %s2, %s218
        %v220 = vld [vmem:[%s215] sm:$0xff]
        %v221 = vld [vmem:[%s181] sm:$0xff]
        %v222 = vsub.f32 %v220, %v221
        %v223 = vadd.f32 %v222, 1e-06
        %v224 = vmul.f32 %v223, %v223
        %vm225 = vcmask 261120
        %v226 = vsel %vm225, %v224, 0.0
        %227 = vadd.xlane.f32.xlu0 %v226
        %v228 = vpop.xlane.xlu0 %227
        %v229 = vrsqrt.pop %v228
        %v230 = vmul.f32 %v228, %v229
        %vm231 = vcmp.eq.f32.partialorder %v228, inf
        %v232 = vsel %vm231, %v228, %v230
        %vm233 = vcmp.eq.f32.partialorder %v228, 0.0
        %v234 = vand.u32 %v228, 2147483648
        %v235 = vsel %vm233, %v234, %v232
        %v236 = vld [vmem:[%s219] sm:$0xff]
        %v237 = vsub.f32 1.0, %v235
        %v238 = vmax.f32 %v237, 0.0
        %v239 = vmul.f32 %v238, %v238
        %v240 = vsub.f32 %v239, %v228
        %v241 = vmul.f32 %v236, %v240
        %v242 = vadd.f32 %v228, %v241
        %vm243 = vcmask 7168
        %v244 = vsel %vm243, %v242, 0.0
        %245 = vadd.xlane.f32.xlu0 %v244
        %v246 = vpop.xlane.xlu0 %245
        %v247 = vrot.slane %v246, 4
        %v248 = vadd.f32 %v246, %v247
        %v249 = vrot.slane %v248, 2
        %v250 = vadd.f32 %v248, %v249
        %v251 = vrot.slane %v250, 1
        %v252 = vadd.f32 %v250, %v251
        %s253 = vtos %v252
        %v254 = vlaneseq
        %v255 = vshrl.u32 %v254, 7
        %v256 = vlaneseq
        %v257 = vand.u32 %v256, 127
        %vm258 = vcmp.eq.s32.totalorder %v255, 0
        %vm259 = vcmp.eq.s32.totalorder %v257, 0
        %vm260 = vmand %vm258, %vm259
        %v261 = vstv %s253
        %v262 = vsel %vm260, %v261, 0.0
        %263 = vst [vmem:[%s211] sm:$0xff] %v262
        %s264 = sand.u32 %s106, 1
        %s265 = scalar_lea.sflag [#allocation4], %s264
        %s266 = sand.u32 %s106, 1
        %s267 = smul.addr %s266, 8
        %s268 = scalar_lea.vmem [#allocation5], %s267
        // Predicated region
        $region37: #{tpu_custom_call.1} parent=31 // pred_check
          %p269 = pneg %p116
        $region38: #{tpu_custom_call.1} parent=31 // pred_check_branch
          %271 = sbr.rel (%p269) target = $region40
        $region39: #{tpu_custom_call.1} parent=31 // pred_region
          %s273 = ssub.s32 128, 128
          %274 = vsyncadd %s265, %s273
          %s275 = smul.addr %s20, 128
          %s276 = scalar_lea.hbm %s3, %s275
          %s278 = sshll.u32 %s268, 4
          %s279 = int_to_ptr.vmem [resolvable:$true] %s278
          %281 = dma.vmem_to_hbm [thread:$0]  %s279, 128, %s276, %s265
        $region40: #{tpu_custom_call.1} parent=31 // pred_fallthru
          _
      $region32: #{tpu_custom_call.1} parent=5 // pred_fallthru
        _
      %p282 = scmp.le.s32.totalorder 2, %s15
      // Predicated region
      $region41: #{tpu_custom_call.1} parent=5 // pred_check
        %p283 = pneg %p282
      $region42: #{tpu_custom_call.1} parent=5 // pred_check_branch
        %285 = sbr.rel (%p283) target = $region44
      $region43: #{tpu_custom_call.1} parent=5 // pred_region
        %s286 = ssub.s32 %s15, 2
        // Predicated region
        $region45: #{tpu_custom_call.1} parent=43 // pred_check
          %p287 = pneg %p122
        $region46: #{tpu_custom_call.1} parent=43 // pred_check_branch
          %289 = sbr.rel (%p287) target = $region48
        $region47: #{tpu_custom_call.1} parent=43 // pred_region
          %s290 = sand.u32 %s107, 1
          %s291 = scalar_lea.sflag [#allocation4], %s290
          %s292 = sand.u32 %s107, 1
          %s293 = smul.addr %s292, 8
          %s294 = scalar_lea.vmem [#allocation5], %s293
          %295 = dma.done %s291, 128
        $region48: #{tpu_custom_call.1} parent=43 // pred_fallthru
          _
      $region44: #{tpu_custom_call.1} parent=5 // pred_fallthru
        _
    $region6: #{tpu_custom_call.1} parent=1 // loop_footer
      %s19 = sadd.s32 1, %s15
    $region7: #{tpu_custom_call.1} parent=1 // loop_footer_branch
      %14 = sbr.rel target = $region3
    $region8: #{tpu_custom_call.1} parent=1 // loop_exit
      _
    %296 = vsyncpa [#allocation3], 1
    %s297 = scalar_lea.sflag [#allocation3], 1
    %298 = vsyncpa %s297, 1
    %299 = vsyncpa [#allocation4], 1
    %s300 = scalar_lea.sflag [#allocation4], 1
    %301 = vsyncpa %s300, 1

</llo_original>
